<compile_context>
chip_gen: v7x
topology: tpu7x:2x2x1
jax: 0.10.0
libtpu: 0.0.40
codegen_flags: <defaults>
</compile_context>

<pallas_src>
import jax
import jax.numpy as jnp
from jax.experimental import pallas as pl
from jax.experimental.pallas import tpu as pltpu

BN_EPS = 1e-5  # F.batch_norm default eps


def _pwdwpw_kernel(x_ref, w1_ref, w2_ref, w3_ref, o_ref):
    # x_ref / o_ref: (C, t_hw) tile, spatial on lanes. w*_ref: (C, C) resident
    # weights with the batch-norm scale already folded in.
    y = jnp.dot(w1_ref[...], x_ref[...].astype(jnp.float32),
                preferred_element_type=jnp.float32)
    y = jnp.clip(y, 0.0, 6.0)  # ReLU6
    y = jnp.clip(jnp.dot(w2_ref[...], y, preferred_element_type=jnp.float32),
                 0.0, 6.0)
    y = jnp.clip(jnp.dot(w3_ref[...], y, preferred_element_type=jnp.float32),
                 0.0, 6.0)
    # Residual: re-read x_ref here instead of holding an f32 copy of x live
    # across the three matmuls (shrinks VMEM/vreg live range).
    o_ref[...] = (y + x_ref[...].astype(jnp.float32)).astype(o_ref.dtype)


def _pick_t_hw(C, HW, N):
    """Lane-tile size: ~2 MiB per-step HBM traffic, v7x-safe VMEM, >=8 steps."""
    target_bytes = 2 * 1024 * 1024            # in+out f32 traffic ~ 8*C*t bytes
    vmem_cap = 24 * 1024 * 1024               # v7x (64 MiB/TC) safe per-step budget
    t = target_bytes // (8 * C)
    t = min(t, vmem_cap // (20 * C))          # dbl-buffered in/out + temps ~20*C*t
    t = max(t, 512)
    # Keep enough grid steps so both v7x TensorCores get work.
    while N * (-(-HW // t)) < 8 and t > 1024:
        t //= 2
    if t >= HW:
        return HW                              # single full-extent spatial block
    return max(128, (t // 128) * 128)          # lane-dense multiple of 128


@jax.jit
def pwdwpw_residual_block(x_nchw, w1, w2, w3):
    """x_nchw: (N, C, H, W). w*: (C_out, C_in, 1, 1) conv weights."""
    N, C, H, W = x_nchw.shape
    HW = H * W
    x = x_nchw.reshape(N, C, HW)               # free reshape, no data movement

    t_hw = _pick_t_hw(C, HW, N)
    n_j = pl.cdiv(HW, t_hw)                    # ragged last block is fine (masked)

    # conv2d with a 1x1 kernel in (C, HW) layout is w[:, :, 0, 0] @ x. Fold the
    # eval-mode batch-norm scale 1/sqrt(running_var + eps) (running_var = 0 per
    # the module's create_batch_norm_params) into the weights.
    scale = 1.0 / jnp.sqrt(jnp.float32(BN_EPS))
    w1m = w1[:, :, 0, 0].astype(jnp.float32) * scale
    w2m = w2[:, :, 0, 0].astype(jnp.float32) * scale
    w3m = w3[:, :, 0, 0].astype(jnp.float32) * scale

    # Explicit VMEM limit: double-buffered in+out f32 tiles + weights + slack,
    # capped at 48 MiB so it stays under v7x's 64 MiB physical VMEM per TC.
    vmem_limit = int(min(48 * 1024 * 1024,
                         max(16 * 1024 * 1024,
                             24 * C * t_hw + 24 * C * C + (4 << 20))))

    out = pl.pallas_call(
        _pwdwpw_kernel,
        out_shape=jax.ShapeDtypeStruct((N, C, HW), x_nchw.dtype),
        grid_spec=pltpu.PrefetchScalarGridSpec(
            num_scalar_prefetch=0,
            grid=(N, n_j),
            in_specs=[
                pl.BlockSpec((None, C, t_hw), lambda n, j: (n, 0, j)),  # x tile
                pl.BlockSpec((C, C), lambda n, j: (0, 0)),              # w1 (resident)
                pl.BlockSpec((C, C), lambda n, j: (0, 0)),              # w2 (resident)
                pl.BlockSpec((C, C), lambda n, j: (0, 0)),              # w3 (resident)
            ],
            out_specs=pl.BlockSpec((None, C, t_hw), lambda n, j: (n, 0, j)),
        ),
        compiler_params=pltpu.CompilerParams(
            dimension_semantics=("parallel", "parallel"),
            vmem_limit_bytes=vmem_limit),
    )(x, w1m, w2m, w3m)

    return out.reshape(N, C, H, W)


def _reference(x_nchw, w1, w2, w3):
    """Pure-JAX reference mirroring the PyTorch forward."""
    scale = 1.0 / jnp.sqrt(jnp.float32(BN_EPS))

    def basic(v, w):
        # 1x1 conv in NCHW: out[n,co,h,w] = sum_ci w[co,ci] * v[n,ci,h,w]
        y = jnp.einsum("oc,nchw->nohw", w[:, :, 0, 0], v.astype(jnp.float32))
        y = y * scale                      # eval-mode BN, mean=0, var=0
        return jnp.clip(y, 0.0, 6.0)       # ReLU6

    y = basic(x_nchw, w1)
    y = basic(y, w2)
    y = basic(y, w3)
    return y + x_nchw                      # residual add


if __name__ == "__main__":
    key = jax.random.PRNGKey(0)
    k_x, k_w1, k_w2, k_w3 = jax.random.split(key, 4)

    N, C, H, W = 2, 8, 16, 16
    x = jax.random.normal(k_x, (N, C, H, W), dtype=jnp.float32)

    # Each DWPWBasic forward call draws a fresh torch.randn(C, C, 1, 1) weight;
    # here the three weights are deterministic, distinct normal draws.
    w1 = jax.random.normal(k_w1, (C, C, 1, 1), dtype=jnp.float32)
    w2 = jax.random.normal(k_w2, (C, C, 1, 1), dtype=jnp.float32)
    w3 = jax.random.normal(k_w3, (C, C, 1, 1), dtype=jnp.float32)

    out = pwdwpw_residual_block(x, w1, w2, w3)
    out = jax.block_until_ready(out)

    ref = _reference(x, w1, w2, w3)
    assert out.shape == (N, C, H, W), out.shape
    assert jnp.allclose(out, ref, atol=1e-4, rtol=1e-4), "mismatch vs reference"

    print("KERNEL_OK")
</pallas_src>

<mosaic_0001>
module attributes {stable_mosaic.version = 11 : i64} {
  func.func @_pwdwpw_kernel(%arg0: i32, %arg1: i32, %arg2: memref<1x8x256xf32, #tpu.memory_space<vmem>>, %arg3: memref<8x8xf32, #tpu.memory_space<vmem>>, %arg4: memref<8x8xf32, #tpu.memory_space<vmem>>, %arg5: memref<8x8xf32, #tpu.memory_space<vmem>>, %arg6: memref<1x8x256xf32, #tpu.memory_space<vmem>>) attributes {dimension_semantics = [#tpu.dimension_semantics<parallel>, #tpu.dimension_semantics<parallel>], iteration_bounds = array<i64: 2, 1>, scalar_prefetch = 0 : i64, scratch_operands = 0 : i64, tpu.core_type = #tpu.core_type<tc>, window_params = [{transform_indices = @transform_0, window_bounds = array<i64: 1, 8, 256>}, {pipeline_mode = #tpu.pipeline_mode<synchronous>, transform_indices = @transform_1, window_bounds = array<i64: 8, 8>}, {pipeline_mode = #tpu.pipeline_mode<synchronous>, transform_indices = @transform_2, window_bounds = array<i64: 8, 8>}, {pipeline_mode = #tpu.pipeline_mode<synchronous>, transform_indices = @transform_3, window_bounds = array<i64: 8, 8>}, {transform_indices = @transform_4, window_bounds = array<i64: 1, 8, 256>}]} {
    %c0 = arith.constant 0 : index
    %c0_0 = arith.constant 0 : index
    %0 = vector.load %arg3[%c0, %c0_0] : memref<8x8xf32, #tpu.memory_space<vmem>>, vector<8x8xf32>
    %c0_1 = arith.constant 0 : index
    %c0_2 = arith.constant 0 : index
    %c0_3 = arith.constant 0 : index
    %1 = vector.load %arg2[%c0_1, %c0_2, %c0_3] : memref<1x8x256xf32, #tpu.memory_space<vmem>>, vector<1x8x256xf32>
    %2 = vector.shape_cast %1 : vector<1x8x256xf32> to vector<8x256xf32>
    %cst = arith.constant dense<0.000000e+00> : vector<8x256xf32>
    %3 = tpu.matmul %0, %2, %cst {dimension_numbers = #tpu.dot_dimension_numbers<[1], [0], [0], [1], [0, 0, 1, 1], [], []>} : vector<8x8xf32>, vector<8x256xf32>, vector<8x256xf32> -> vector<8x256xf32>
    %cst_4 = arith.constant 0.000000e+00 : f32
    %cst_5 = arith.constant 6.000000e+00 : f32
    %4 = vector.broadcast %cst_4 : f32 to vector<8x256xf32>
    %5 = arith.maximumf %4, %3 : vector<8x256xf32>
    %6 = vector.broadcast %cst_5 : f32 to vector<8x256xf32>
    %7 = arith.minimumf %6, %5 : vector<8x256xf32>
    %c0_6 = arith.constant 0 : index
    %c0_7 = arith.constant 0 : index
    %8 = vector.load %arg4[%c0_6, %c0_7] : memref<8x8xf32, #tpu.memory_space<vmem>>, vector<8x8xf32>
    %cst_8 = arith.constant dense<0.000000e+00> : vector<8x256xf32>
    %9 = tpu.matmul %8, %7, %cst_8 {dimension_numbers = #tpu.dot_dimension_numbers<[1], [0], [0], [1], [0, 0, 1, 1], [], []>} : vector<8x8xf32>, vector<8x256xf32>, vector<8x256xf32> -> vector<8x256xf32>
    %cst_9 = arith.constant 0.000000e+00 : f32
    %cst_10 = arith.constant 6.000000e+00 : f32
    %10 = vector.broadcast %cst_9 : f32 to vector<8x256xf32>
    %11 = arith.maximumf %10, %9 : vector<8x256xf32>
    %12 = vector.broadcast %cst_10 : f32 to vector<8x256xf32>
    %13 = arith.minimumf %12, %11 : vector<8x256xf32>
    %c0_11 = arith.constant 0 : index
    %c0_12 = arith.constant 0 : index
    %14 = vector.load %arg5[%c0_11, %c0_12] : memref<8x8xf32, #tpu.memory_space<vmem>>, vector<8x8xf32>
    %cst_13 = arith.constant dense<0.000000e+00> : vector<8x256xf32>
    %15 = tpu.matmul %14, %13, %cst_13 {dimension_numbers = #tpu.dot_dimension_numbers<[1], [0], [0], [1], [0, 0, 1, 1], [], []>} : vector<8x8xf32>, vector<8x256xf32>, vector<8x256xf32> -> vector<8x256xf32>
    %cst_14 = arith.constant 0.000000e+00 : f32
    %cst_15 = arith.constant 6.000000e+00 : f32
    %16 = vector.broadcast %cst_14 : f32 to vector<8x256xf32>
    %17 = arith.maximumf %16, %15 : vector<8x256xf32>
    %18 = vector.broadcast %cst_15 : f32 to vector<8x256xf32>
    %19 = arith.minimumf %18, %17 : vector<8x256xf32>
    %c0_16 = arith.constant 0 : index
    %c0_17 = arith.constant 0 : index
    %c0_18 = arith.constant 0 : index
    %20 = vector.load %arg2[%c0_16, %c0_17, %c0_18] : memref<1x8x256xf32, #tpu.memory_space<vmem>>, vector<1x8x256xf32>
    %21 = vector.shape_cast %20 : vector<1x8x256xf32> to vector<8x256xf32>
    %22 = arith.addf %19, %21 : vector<8x256xf32>
    %c0_19 = arith.constant 0 : index
    %c0_20 = arith.constant 0 : index
    %c0_21 = arith.constant 0 : index
    %23 = vector.load %arg6[%c0_19, %c0_20, %c0_21] : memref<1x8x256xf32, #tpu.memory_space<vmem>>, vector<1x8x256xf32>
    %24 = vector.shape_cast %23 : vector<1x8x256xf32> to vector<8x256xf32>
    %25 = vector.shape_cast %22 : vector<8x256xf32> to vector<1x8x256xf32>
    tpu.vector_store %arg6[%c0_19, %c0_20, %c0_21], %25 {strides = array<i32>} : memref<1x8x256xf32, #tpu.memory_space<vmem>>, vector<1x8x256xf32>,
    return
  }
  func.func @transform_0(%arg0: i32, %arg1: i32) -> (i32, i32, i32) {
    %c0_i32 = arith.constant 0 : i32
    %c0_i32_0 = arith.constant 0 : i32
    return %arg0, %c0_i32, %arg1 : i32, i32, i32
  }
  func.func @transform_1(%arg0: i32, %arg1: i32) -> (i32, i32) {
    %c0_i32 = arith.constant 0 : i32
    %c0_i32_0 = arith.constant 0 : i32
    %c0_i32_1 = arith.constant 0 : i32
    return %c0_i32, %c0_i32_0 : i32, i32
  }
  func.func @transform_2(%arg0: i32, %arg1: i32) -> (i32, i32) {
    %c0_i32 = arith.constant 0 : i32
    %c0_i32_0 = arith.constant 0 : i32
    %c0_i32_1 = arith.constant 0 : i32
    return %c0_i32, %c0_i32_0 : i32, i32
  }
  func.func @transform_3(%arg0: i32, %arg1: i32) -> (i32, i32) {
    %c0_i32 = arith.constant 0 : i32
    %c0_i32_0 = arith.constant 0 : i32
    %c0_i32_1 = arith.constant 0 : i32
    return %c0_i32, %c0_i32_0 : i32, i32
  }
  func.func @transform_4(%arg0: i32, %arg1: i32) -> (i32, i32, i32) {
    %c0_i32 = arith.constant 0 : i32
    %c0_i32_0 = arith.constant 0 : i32
    return %arg0, %c0_i32, %arg1 : i32, i32, i32
  }
}

</mosaic_0001>

<llo_original>
// kernel: pwdwpw_residual_block.1
$region0: #{pwdwpw_residual_block.1}
  #allocation0 [shape = 'u32[]', space=smem, size = 0x4, offset = 0x4, fixed_abs, tag = 'smem constant byte address 0x4 - core index']
  #allocation1 [shape = 'u32[144,128]{1,0:T(1,128)}', space=vmem, size = 0x12000, scoped, tag = 'internal scratch']
  %s0 = inlined_call_operand.vmem [shape: f32[2,8,256], index: 0, kind: input, shape index: {}]
  %s1 = inlined_call_operand.vmem [shape: f32[8,8], index: 1, kind: input, shape index: {}]
  %s2 = inlined_call_operand.vmem [shape: f32[8,8], index: 2, kind: input, shape index: {}]
  %s3 = inlined_call_operand.vmem [shape: f32[8,8], index: 3, kind: input, shape index: {}]
  %s4 = inlined_call_operand.vmem [shape: f32[2,8,256], index: 4, kind: output, shape index: {}]
  %s5 = sld [smem:[#allocation0]]
  $region49: #{pwdwpw_residual_block.1} parent=0
    _
  %s7 = ssub.s32 1, %s5
  %s8 = scalar_select 0, %s7, %s5
  loop: start=0, step=1, limit=4
  $region2: #{pwdwpw_residual_block.1} parent=0 // loop_pre_header
    _
  $region3: #{pwdwpw_residual_block.1} parent=0 // loop_header
    %s10 = sphi 0, %s14
    %p11 = scmp.ge.s32.totalorder %s10, 4
    %s17 = sphi 0, %s29
    %s18 = sphi 0, %s25
    %s19 = sphi 0, %s17
    %s20 = sphi 0, %s18
    %s21 = sphi 0, %s19
    %s22 = sphi 0, %s20
    %s34 = sphi 0, %s36
    %s37 = sphi 0, %s34
    %s38 = sphi 0, %s37
    %s54 = sphi 0, %s38
    %s58 = sphi 0, %s58
    %s60 = sphi 0, %s58
    %s61 = sphi 0, %s60
    %s75 = sphi 0, %s61
    %s79 = sphi 0, %s79
    %s81 = sphi 0, %s79
    %s82 = sphi 0, %s81
    %s96 = sphi 0, %s82
    %s100 = sphi 0, %s100
    %s102 = sphi 0, %s100
    %s103 = sphi 0, %s102
    %s117 = sphi 0, %s103
    %s125 = sphi 0, %s127
    %s128 = sphi 0, %s125
    %s129 = sphi 0, %s128
    %s145 = sphi 0, %s129
  $region4: #{pwdwpw_residual_block.1} parent=0 // loop_header_branch
    %13 = sbr.rel (%p11) target = $region8
  $region5: #{pwdwpw_residual_block.1} parent=0 // loop_body
    %s15 = ssub.s32 %s10, 1
    %s16 = ssub.s32 %s10, 2
    %s23 = sadd.s32 1, %s18
    %p24 = scmp.ge.s32.totalorder %s23, 1
    %s25 = scalar_select %p24, 0, %s23
    %s26 = sadd.s32 1, %s17
    %s27 = scalar_select %p24, %s26, %s17
    %p28 = scmp.ge.s32.totalorder %s27, 2
    %s29 = scalar_select %p28, 0, %s27
    %s30 = ssub.s32 %s17, %s29
    %s31 = ssub.s32 %s18, %s25
    %s32 = sor.u32 %s30, %s31
    %p33 = scmp.eq.s32.totalorder %s32, 0
    %s35 = sadd.s32 %s34, 1
    %s36 = scalar_select %p33, %s34, %s35
    %p39 = pneg %p33
    %p40 = scmp.eq.s32.totalorder %s10, 1
    %p41 = por %p39, %p40
    %p42 = scmp.ne.s32.totalorder %s34, %s37
    %p43 = scmp.eq.s32.totalorder %s10, 0
    %p44 = por %p42, %p43
    %p45 = scmp.ne.s32.totalorder %s34, %s37
    %p46 = scmp.eq.s32.totalorder %s15, 1
    %p47 = por %p45, %p46
    %p48 = scmp.ne.s32.totalorder %s37, %s38
    %p49 = scmp.eq.s32.totalorder %s15, 0
    %p50 = por %p48, %p49
    %p51 = scmp.ne.s32.totalorder %s37, %s38
    %p52 = scmp.eq.s32.totalorder %s16, 1
    %p53 = por %p51, %p52
    %p55 = scmp.ne.s32.totalorder %s38, %s54
    %p56 = scmp.eq.s32.totalorder %s16, 0
    %p57 = por %p55, %p56
    %s59 = sadd.s32 %s58, 1
    %p62 = scmp.eq.s32.totalorder %s10, 1
    %p63 = scmp.ne.s32.totalorder %s58, %s60
    %p64 = scmp.eq.s32.totalorder %s10, 0
    %p65 = por %p63, %p64
    %p66 = scmp.ne.s32.totalorder %s58, %s60
    %p67 = scmp.eq.s32.totalorder %s15, 1
    %p68 = por %p66, %p67
    %p69 = scmp.ne.s32.totalorder %s60, %s61
    %p70 = scmp.eq.s32.totalorder %s15, 0
    %p71 = por %p69, %p70
    %p72 = scmp.ne.s32.totalorder %s60, %s61
    %p73 = scmp.eq.s32.totalorder %s16, 1
    %p74 = por %p72, %p73
    %p76 = scmp.ne.s32.totalorder %s61, %s75
    %p77 = scmp.eq.s32.totalorder %s16, 0
    %p78 = por %p76, %p77
    %s80 = sadd.s32 %s79, 1
    %p83 = scmp.eq.s32.totalorder %s10, 1
    %p84 = scmp.ne.s32.totalorder %s79, %s81
    %p85 = scmp.eq.s32.totalorder %s10, 0
    %p86 = por %p84, %p85
    %p87 = scmp.ne.s32.totalorder %s79, %s81
    %p88 = scmp.eq.s32.totalorder %s15, 1
    %p89 = por %p87, %p88
    %p90 = scmp.ne.s32.totalorder %s81, %s82
    %p91 = scmp.eq.s32.totalorder %s15, 0
    %p92 = por %p90, %p91
    %p93 = scmp.ne.s32.totalorder %s81, %s82
    %p94 = scmp.eq.s32.totalorder %s16, 1
    %p95 = por %p93, %p94
    %p97 = scmp.ne.s32.totalorder %s82, %s96
    %p98 = scmp.eq.s32.totalorder %s16, 0
    %p99 = por %p97, %p98
    %s101 = sadd.s32 %s100, 1
    %p104 = scmp.eq.s32.totalorder %s10, 1
    %p105 = scmp.ne.s32.totalorder %s100, %s102
    %p106 = scmp.eq.s32.totalorder %s10, 0
    %p107 = por %p105, %p106
    %p108 = scmp.ne.s32.totalorder %s100, %s102
    %p109 = scmp.eq.s32.totalorder %s15, 1
    %p110 = por %p108, %p109
    %p111 = scmp.ne.s32.totalorder %s102, %s103
    %p112 = scmp.eq.s32.totalorder %s15, 0
    %p113 = por %p111, %p112
    %p114 = scmp.ne.s32.totalorder %s102, %s103
    %p115 = scmp.eq.s32.totalorder %s16, 1
    %p116 = por %p114, %p115
    %p118 = scmp.ne.s32.totalorder %s103, %s117
    %p119 = scmp.eq.s32.totalorder %s16, 0
    %p120 = por %p118, %p119
    %s121 = ssub.s32 %s17, %s29
    %s122 = ssub.s32 %s18, %s25
    %s123 = sor.u32 %s121, %s122
    %p124 = scmp.eq.s32.totalorder %s123, 0
    %s126 = sadd.s32 %s125, 1
    %s127 = scalar_select %p124, %s125, %s126
    %p130 = pneg %p124
    %p131 = scmp.eq.s32.totalorder %s10, 1
    %p132 = por %p130, %p131
    %p133 = scmp.ne.s32.totalorder %s125, %s128
    %p134 = scmp.eq.s32.totalorder %s10, 0
    %p135 = por %p133, %p134
    %p136 = scmp.ne.s32.totalorder %s125, %s128
    %p137 = scmp.eq.s32.totalorder %s15, 1
    %p138 = por %p136, %p137
    %p139 = scmp.ne.s32.totalorder %s128, %s129
    %p140 = scmp.eq.s32.totalorder %s15, 0
    %p141 = por %p139, %p140
    %p142 = scmp.ne.s32.totalorder %s128, %s129
    %p143 = scmp.eq.s32.totalorder %s16, 1
    %p144 = por %p142, %p143
    %p146 = scmp.ne.s32.totalorder %s129, %s145
    %p147 = scmp.eq.s32.totalorder %s16, 0
    %p148 = por %p146, %p147
    %p149 = scmp.le.s32.totalorder 1, %s10
    %p150 = scmp.lt.s32.totalorder %s10, 3
    %p151 = pnand %p149, %p150
    %p152 = pneg %p151
    // Predicated region
    $region9: #{pwdwpw_residual_block.1} parent=5 // pred_check
      _
    $region10: #{pwdwpw_residual_block.1} parent=5 // pred_check_branch
      %154 = sbr.rel (%p151) target = $region12
    $region11: #{pwdwpw_residual_block.1} parent=5 // pred_region
      %s155 = ssub.s32 %s10, 1
      // Predicated region
      $region13: #{pwdwpw_residual_block.1} parent=11 // pred_check
        %p156 = pneg %p71
      $region14: #{pwdwpw_residual_block.1} parent=11 // pred_check_branch
        %158 = sbr.rel (%p156) target = $region16
      $region15: #{pwdwpw_residual_block.1} parent=11 // pred_region
        _
      $region16: #{pwdwpw_residual_block.1} parent=11 // pred_fallthru
        _
      // Predicated region
      $region17: #{pwdwpw_residual_block.1} parent=11 // pred_check
        %p159 = pneg %p92
      $region18: #{pwdwpw_residual_block.1} parent=11 // pred_check_branch
        %161 = sbr.rel (%p159) target = $region20
      $region19: #{pwdwpw_residual_block.1} parent=11 // pred_region
        _
      $region20: #{pwdwpw_residual_block.1} parent=11 // pred_fallthru
        _
      // Predicated region
      $region21: #{pwdwpw_residual_block.1} parent=11 // pred_check
        %p162 = pneg %p113
      $region22: #{pwdwpw_residual_block.1} parent=11 // pred_check_branch
        %164 = sbr.rel (%p162) target = $region24
      $region23: #{pwdwpw_residual_block.1} parent=11 // pred_region
        _
      $region24: #{pwdwpw_residual_block.1} parent=11 // pred_fallthru
        _
    $region12: #{pwdwpw_residual_block.1} parent=5 // pred_fallthru
      _
    %p165 = scmp.lt.s32.totalorder %s10, 2
    // Predicated region
    $region25: #{pwdwpw_residual_block.1} parent=5 // pred_check
      %p166 = pneg %p165
    $region26: #{pwdwpw_residual_block.1} parent=5 // pred_check_branch
      %168 = sbr.rel (%p166) target = $region28
    $region27: #{pwdwpw_residual_block.1} parent=5 // pred_region
      // Predicated region
      $region29: #{pwdwpw_residual_block.1} parent=27 // pred_check
        %p169 = pneg %p44
      $region30: #{pwdwpw_residual_block.1} parent=27 // pred_check_branch
        %171 = sbr.rel (%p169) target = $region32
      $region31: #{pwdwpw_residual_block.1} parent=27 // pred_region
        %s172 = smul.u32 2, %s18
        %p173 = scmp.lt.s32.totalorder %s17, 1
        %s174 = scalar_select %p173, %s17, 1
        %p175 = scmp.lt.s32.totalorder %s172, 1
        %s176 = scalar_select %p175, %s172, 1
        %s177 = smul.addr %s174, 2
        %s178 = sadd.s32 %s176, %s177
        %s179 = smul.addr %s178, 8
        %s180 = scalar_lea.vmem %s0, %s179
        %s181 = smul.u32 2, %s18
      $region32: #{pwdwpw_residual_block.1} parent=27 // pred_fallthru
        _
    $region28: #{pwdwpw_residual_block.1} parent=5 // pred_fallthru
      _
    %p182 = scmp.le.s32.totalorder 1, %s10
    %p183 = scmp.lt.s32.totalorder %s10, 3
    %p184 = pnand %p182, %p183
    %p185 = pneg %p184
    // Predicated region
    $region33: #{pwdwpw_residual_block.1} parent=5 // pred_check
      _
    $region34: #{pwdwpw_residual_block.1} parent=5 // pred_check_branch
      %187 = sbr.rel (%p184) target = $region36
    $region35: #{pwdwpw_residual_block.1} parent=5 // pred_region
      %s188 = ssub.s32 %s10, 1
      %s189 = smul.u32 2, %s20
      %p190 = scmp.lt.s32.totalorder %s19, 1
      %s191 = scalar_select %p190, %s19, 1
      %p192 = scmp.lt.s32.totalorder %s189, 1
      %s193 = scalar_select %p192, %s189, 1
      %s194 = smul.addr %s191, 2
      %s195 = sadd.s32 %s193, %s194
      %s196 = smul.addr %s195, 8
      %s197 = scalar_lea.vmem %s0, %s196
      %p198 = pneg %p50
      %p199 = pneg %p47
      %p200 = pneg %p71
      %p201 = pneg %p68
      %p202 = pneg %p92
      %p203 = pneg %p89
      %p204 = pneg %p113
      %p205 = pneg %p110
      %p206 = pneg %p141
      %p207 = pneg %p138
      %s208 = smul.u32 2, %s20
      %p209 = scmp.lt.s32.totalorder %s19, 1
      %s210 = scalar_select %p209, %s19, 1
      %p211 = scmp.lt.s32.totalorder %s208, 1
      %s212 = scalar_select %p211, %s208, 1
      %s213 = smul.addr %s210, 2
      %s214 = sadd.s32 %s212, %s213
      %s215 = smul.addr %s214, 8
      %s216 = scalar_lea.vmem %s4, %s215
      %s217 = smul.u32 2, %s20
      %p218 = scmp.lt.s32.totalorder %s19, 1
      %s219 = scalar_select %p218, %s19, 1
      %p220 = scmp.lt.s32.totalorder %s217, 1
      %s221 = scalar_select %p220, %s217, 1
      %s222 = smul.addr %s219, 2
      %s223 = sadd.s32 %s221, %s222
      %s224 = smul.addr %s223, 8
      %s225 = scalar_lea.vmem %s0, %s224
      %s226 = smul.u32 2, %s20
      %s227 = smul.u32 2, %s20
      %p228 = scmp.lt.s32.totalorder %s19, 1
      %s229 = scalar_select %p228, %s19, 1
      %p230 = scmp.lt.s32.totalorder %s227, 1
      %s231 = scalar_select %p230, %s227, 1
      %s232 = smul.addr %s229, 2
      %s233 = sadd.s32 %s231, %s232
      %s234 = smul.addr %s233, 8
      %s235 = scalar_lea.vmem %s4, %s234
      %s236 = smul.u32 2, %s20
      %v237 = vld [vmem:[%s1] sm:$0xff]
      %v238 = vld [vmem:[%s225] sm:$0xff]
      %v239 = vld [vmem:[%s225 + $0x8] sm:$0xff]
      %vm240 = vcmask 64512
      %v242 = vsel %vm240, %v237, 0
      %244 = vmatprep.subr.mxu0 %v239
      %245 = vmatpush1.msra.mxu0 %v238
      %246 = vmatprep.subr.mxu0 0.0
      %247 = vmatpush1.msra.mxu0 0.0
      %248 = vmatprep.subr.mxu0 0.0
      %249 = vmatpush1.msra.mxu0 0.0
      %250 = vmatprep.subr.mxu0 0.0
      %251 = vmatpush1.msra.mxu0 0.0
      %252 = vmatprep.subr.mxu0 0.0
      %253 = vmatpush1.msra.mxu0 0.0
      %254 = vmatprep.subr.mxu0 0.0
      %255 = vmatpush1.msra.mxu0 0.0
      %256 = vmatprep.subr.mxu0 0.0
      %257 = vmatpush1.msra.mxu0 0.0
      %258 = vmatprep.subr.mxu0 0.0
      %259 = vmatpush1.msra.mxu0 0.0
      %260 = vmatprep.subr.mxu0 0.0
      %261 = vmatpush1.msra.mxu0 0.0
      %262 = vmatprep.subr.mxu0 0.0
      %263 = vmatpush1.msra.mxu0 0.0
      %264 = vmatprep.subr.mxu0 0.0
      %265 = vmatpush1.msra.mxu0 0.0
      %266 = vmatprep.subr.mxu0 0.0
      %267 = vmatpush1.msra.mxu0 0.0
      %268 = vmatprep.subr.mxu0 0.0
      %269 = vmatpush1.msra.mxu0 0.0
      %270 = vmatprep.subr.mxu0 0.0
      %271 = vmatpush1.msra.mxu0 0.0
      %272 = vmatprep.subr.mxu0 0.0
      %273 = vmatpush1.msra.mxu0 0.0
      %274 = vmatprep.subr.mxu0 0.0
      %275 = vmatpush1.msra.mxu0 0.0
      %276 = vmatprep.subr.mxu0 0.0
      %277 = vmatpush1.msra.mxu0 0.0
      %278 = vmatprep.subr.mxu0 0.0
      %279 = vmatpush1.msra.mxu0 0.0
      %280 = vmatprep.subr.mxu0 0.0
      %281 = vmatpush1.msra.mxu0 0.0
      %282 = vmatprep.subr.mxu0 0.0
      %283 = vmatpush1.msra.mxu0 0.0
      %284 = vmatprep.subr.mxu0 0.0
      %285 = vmatpush1.msra.mxu0 0.0
      %286 = vmatprep.subr.mxu0 0.0
      %287 = vmatpush1.msra.mxu0 0.0
      %288 = vmatprep.subr.mxu0 0.0
      %289 = vmatpush1.msra.mxu0 0.0
      %290 = vmatprep.subr.mxu0 0.0
      %291 = vmatpush1.msra.mxu0 0.0
      %292 = vmatprep.subr.mxu0 0.0
      %293 = vmatpush1.msra.mxu0 0.0
      %294 = vmatprep.subr.mxu0 0.0
      %295 = vmatpush1.msra.mxu0 0.0
      %296 = vmatprep.subr.mxu0 0.0
      %297 = vmatpush1.msra.mxu0 0.0
      %298 = vmatprep.subr.mxu0 0.0
      %299 = vmatpush1.msra.mxu0 0.0
      %300 = vmatprep.subr.mxu0 0.0
      %301 = vmatpush1.msra.mxu0 0.0
      %302 = vmatprep.subr.mxu0 0.0
      %303 = vmatpush1.msra.mxu0 0.0
      %304 = vmatprep.subr.mxu0 0.0
      %305 = vmatpush1.msra.mxu0 0.0
      %306 = vmatprep.subr.mxu0 0.0
      %307 = vmatpush1.msra.mxu0 0.0
      %308 = vmatprep.mubr.f32.mxu0 0.0
      %309 = vmatmul.mubr.f32.gmra.mrb[0].mxu0 %v242
      %v310 = vpop.f32.mrb[0].mxu0
      %v311 = vadd.f32 0.0, %v310
      %v312 = vpop.f32.mrb[0].mxu0
      %v313 = vadd.f32 0.0, %v312
      %314 = vdwg.mxu0
      %v315 = vmax.f32 %v311, 0.0
      %v316 = vmax.f32 %v313, 0.0
      %v317 = vmin.f32 %v315, 6.0
      %v318 = vmin.f32 %v316, 6.0
      %v319 = vld [vmem:[%s2] sm:$0xff]
      %v321 = vsel %vm240, %v319, 0
      %323 = vmatprep.subr.mxu0 %v318
      %324 = vmatpush1.msra.mxu0 %v317
      %325 = vmatprep.subr.mxu0 0.0
      %326 = vmatpush1.msra.mxu0 0.0
      %327 = vmatprep.subr.mxu0 0.0
      %328 = vmatpush1.msra.mxu0 0.0
      %329 = vmatprep.subr.mxu0 0.0
      %330 = vmatpush1.msra.mxu0 0.0
      %331 = vmatprep.subr.mxu0 0.0
      %332 = vmatpush1.msra.mxu0 0.0
      %333 = vmatprep.subr.mxu0 0.0
      %334 = vmatpush1.msra.mxu0 0.0
      %335 = vmatprep.subr.mxu0 0.0
      %336 = vmatpush1.msra.mxu0 0.0
      %337 = vmatprep.subr.mxu0 0.0
      %338 = vmatpush1.msra.mxu0 0.0
      %339 = vmatprep.subr.mxu0 0.0
      %340 = vmatpush1.msra.mxu0 0.0
      %341 = vmatprep.subr.mxu0 0.0
      %342 = vmatpush1.msra.mxu0 0.0
      %343 = vmatprep.subr.mxu0 0.0
      %344 = vmatpush1.msra.mxu0 0.0
      %345 = vmatprep.subr.mxu0 0.0
      %346 = vmatpush1.msra.mxu0 0.0
      %347 = vmatprep.subr.mxu0 0.0
      %348 = vmatpush1.msra.mxu0 0.0
      %349 = vmatprep.subr.mxu0 0.0
      %350 = vmatpush1.msra.mxu0 0.0
      %351 = vmatprep.subr.mxu0 0.0
      %352 = vmatpush1.msra.mxu0 0.0
      %353 = vmatprep.subr.mxu0 0.0
      %354 = vmatpush1.msra.mxu0 0.0
      %355 = vmatprep.subr.mxu0 0.0
      %356 = vmatpush1.msra.mxu0 0.0
      %357 = vmatprep.subr.mxu0 0.0
      %358 = vmatpush1.msra.mxu0 0.0
      %359 = vmatprep.subr.mxu0 0.0
      %360 = vmatpush1.msra.mxu0 0.0
      %361 = vmatprep.subr.mxu0 0.0
      %362 = vmatpush1.msra.mxu0 0.0
      %363 = vmatprep.subr.mxu0 0.0
      %364 = vmatpush1.msra.mxu0 0.0
      %365 = vmatprep.subr.mxu0 0.0
      %366 = vmatpush1.msra.mxu0 0.0
      %367 = vmatprep.subr.mxu0 0.0
      %368 = vmatpush1.msra.mxu0 0.0
      %369 = vmatprep.subr.mxu0 0.0
      %370 = vmatpush1.msra.mxu0 0.0
      %371 = vmatprep.subr.mxu0 0.0
      %372 = vmatpush1.msra.mxu0 0.0
      %373 = vmatprep.subr.mxu0 0.0
      %374 = vmatpush1.msra.mxu0 0.0
      %375 = vmatprep.subr.mxu0 0.0
      %376 = vmatpush1.msra.mxu0 0.0
      %377 = vmatprep.subr.mxu0 0.0
      %378 = vmatpush1.msra.mxu0 0.0
      %379 = vmatprep.subr.mxu0 0.0
      %380 = vmatpush1.msra.mxu0 0.0
      %381 = vmatprep.subr.mxu0 0.0
      %382 = vmatpush1.msra.mxu0 0.0
      %383 = vmatprep.subr.mxu0 0.0
      %384 = vmatpush1.msra.mxu0 0.0
      %385 = vmatprep.subr.mxu0 0.0
      %386 = vmatpush1.msra.mxu0 0.0
      %387 = vmatprep.mubr.f32.mxu0 0.0
      %388 = vmatmul.mubr.f32.gmra.mrb[0].mxu0 %v321
      %v389 = vpop.f32.mrb[0].mxu0
      %v390 = vadd.f32 0.0, %v389
      %v391 = vpop.f32.mrb[0].mxu0
      %v392 = vadd.f32 0.0, %v391
      %393 = vdwg.mxu0
      %v394 = vmax.f32 %v390, 0.0
      %v395 = vmax.f32 %v392, 0.0
      %v396 = vmin.f32 %v394, 6.0
      %v397 = vmin.f32 %v395, 6.0
      %v398 = vld [vmem:[%s3] sm:$0xff]
      %v400 = vsel %vm240, %v398, 0
      %402 = vmatprep.subr.mxu0 %v397
      %403 = vmatpush1.msra.mxu0 %v396
      %404 = vmatprep.subr.mxu0 0.0
      %405 = vmatpush1.msra.mxu0 0.0
      %406 = vmatprep.subr.mxu0 0.0
      %407 = vmatpush1.msra.mxu0 0.0
      %408 = vmatprep.subr.mxu0 0.0
      %409 = vmatpush1.msra.mxu0 0.0
      %410 = vmatprep.subr.mxu0 0.0
      %411 = vmatpush1.msra.mxu0 0.0
      %412 = vmatprep.subr.mxu0 0.0
      %413 = vmatpush1.msra.mxu0 0.0
      %414 = vmatprep.subr.mxu0 0.0
      %415 = vmatpush1.msra.mxu0 0.0
      %416 = vmatprep.subr.mxu0 0.0
      %417 = vmatpush1.msra.mxu0 0.0
      %418 = vmatprep.subr.mxu0 0.0
      %419 = vmatpush1.msra.mxu0 0.0
      %420 = vmatprep.subr.mxu0 0.0
      %421 = vmatpush1.msra.mxu0 0.0
      %422 = vmatprep.subr.mxu0 0.0
      %423 = vmatpush1.msra.mxu0 0.0
      %424 = vmatprep.subr.mxu0 0.0
      %425 = vmatpush1.msra.mxu0 0.0
      %426 = vmatprep.subr.mxu0 0.0
      %427 = vmatpush1.msra.mxu0 0.0
      %428 = vmatprep.subr.mxu0 0.0
      %429 = vmatpush1.msra.mxu0 0.0
      %430 = vmatprep.subr.mxu0 0.0
      %431 = vmatpush1.msra.mxu0 0.0
      %432 = vmatprep.subr.mxu0 0.0
      %433 = vmatpush1.msra.mxu0 0.0
      %434 = vmatprep.subr.mxu0 0.0
      %435 = vmatpush1.msra.mxu0 0.0
      %436 = vmatprep.subr.mxu0 0.0
      %437 = vmatpush1.msra.mxu0 0.0
      %438 = vmatprep.subr.mxu0 0.0
      %439 = vmatpush1.msra.mxu0 0.0
      %440 = vmatprep.subr.mxu0 0.0
      %441 = vmatpush1.msra.mxu0 0.0
      %442 = vmatprep.subr.mxu0 0.0
      %443 = vmatpush1.msra.mxu0 0.0
      %444 = vmatprep.subr.mxu0 0.0
      %445 = vmatpush1.msra.mxu0 0.0
      %446 = vmatprep.subr.mxu0 0.0
      %447 = vmatpush1.msra.mxu0 0.0
      %448 = vmatprep.subr.mxu0 0.0
      %449 = vmatpush1.msra.mxu0 0.0
      %450 = vmatprep.subr.mxu0 0.0
      %451 = vmatpush1.msra.mxu0 0.0
      %452 = vmatprep.subr.mxu0 0.0
      %453 = vmatpush1.msra.mxu0 0.0
      %454 = vmatprep.subr.mxu0 0.0
      %455 = vmatpush1.msra.mxu0 0.0
      %456 = vmatprep.subr.mxu0 0.0
      %457 = vmatpush1.msra.mxu0 0.0
      %458 = vmatprep.subr.mxu0 0.0
      %459 = vmatpush1.msra.mxu0 0.0
      %460 = vmatprep.subr.mxu0 0.0
      %461 = vmatpush1.msra.mxu0 0.0
      %462 = vmatprep.subr.mxu0 0.0
      %463 = vmatpush1.msra.mxu0 0.0
      %464 = vmatprep.subr.mxu0 0.0
      %465 = vmatpush1.msra.mxu0 0.0
      %466 = vmatprep.mubr.f32.mxu0 0.0
      %467 = vmatmul.mubr.f32.gmra.mrb[0].mxu0 %v400
      %v468 = vpop.f32.mrb[0].mxu0
      %v469 = vadd.f32 0.0, %v468
      %v470 = vpop.f32.mrb[0].mxu0
      %v471 = vadd.f32 0.0, %v470
      %472 = vdwg.mxu0
      %v473 = vmax.f32 %v469, 0.0
      %v474 = vmax.f32 %v471, 0.0
      %v475 = vmin.f32 %v473, 6.0
      %v476 = vmin.f32 %v474, 6.0
      %v477 = vadd.f32 %v475, %v238
      %v478 = vadd.f32 %v476, %v239
      %479 = vst [vmem:[%s235] sm:$0xff] %v477
      %480 = vst [vmem:[%s235 + $0x8] sm:$0xff] %v478
      %s481 = smul.u32 2, %s20
      %p482 = scmp.lt.s32.totalorder %s19, 1
      %s483 = scalar_select %p482, %s19, 1
      %p484 = scmp.lt.s32.totalorder %s481, 1
      %s485 = scalar_select %p484, %s481, 1
      %s486 = smul.addr %s483, 2
      %s487 = sadd.s32 %s485, %s486
      %s488 = smul.addr %s487, 8
      %s489 = scalar_lea.vmem %s4, %s488
      // Predicated region
      $region37: #{pwdwpw_residual_block.1} parent=35 // pred_check
        %p490 = pneg %p138
      $region38: #{pwdwpw_residual_block.1} parent=35 // pred_check_branch
        %492 = sbr.rel (%p490) target = $region40
      $region39: #{pwdwpw_residual_block.1} parent=35 // pred_region
        %s493 = smul.u32 2, %s20
      $region40: #{pwdwpw_residual_block.1} parent=35 // pred_fallthru
        _
    $region36: #{pwdwpw_residual_block.1} parent=5 // pred_fallthru
      _
    %p494 = scmp.le.s32.totalorder 2, %s10
    // Predicated region
    $region41: #{pwdwpw_residual_block.1} parent=5 // pred_check
      %p495 = pneg %p494
    $region42: #{pwdwpw_residual_block.1} parent=5 // pred_check_branch
      %497 = sbr.rel (%p495) target = $region44
    $region43: #{pwdwpw_residual_block.1} parent=5 // pred_region
      %s498 = ssub.s32 %s10, 2
      // Predicated region
      $region45: #{pwdwpw_residual_block.1} parent=43 // pred_check
        %p499 = pneg %p144
      $region46: #{pwdwpw_residual_block.1} parent=43 // pred_check_branch
        %501 = sbr.rel (%p499) target = $region48
      $region47: #{pwdwpw_residual_block.1} parent=43 // pred_region
        %s502 = smul.u32 2, %s22
        %p503 = scmp.lt.s32.totalorder %s21, 1
        %s504 = scalar_select %p503, %s21, 1
        %p505 = scmp.lt.s32.totalorder %s502, 1
        %s506 = scalar_select %p505, %s502, 1
        %s507 = smul.addr %s504, 2
        %s508 = sadd.s32 %s506, %s507
        %s509 = smul.addr %s508, 8
        %s510 = scalar_lea.vmem %s4, %s509
      $region48: #{pwdwpw_residual_block.1} parent=43 // pred_fallthru
        _
    $region44: #{pwdwpw_residual_block.1} parent=5 // pred_fallthru
      _
  $region6: #{pwdwpw_residual_block.1} parent=0 // loop_footer
    %s14 = sadd.s32 1, %s10
  $region7: #{pwdwpw_residual_block.1} parent=0 // loop_footer_branch
    %9 = sbr.rel target = $region3
  $region8: #{pwdwpw_residual_block.1} parent=0 // loop_exit
    _

</llo_original>
